<compile_context>
chip_gen: v7x
topology: tpu7x:2x2x1
jax: 0.10.0
libtpu: 0.0.40
codegen_flags: <defaults>
</compile_context>

<pallas_src>
import functools

import jax
import jax.numpy as jnp
from jax import lax
from jax.experimental import pallas as pl
from jax.experimental.pallas import tpu as pltpu

BN_EPS = 1e-5


def _round_up(x, m):
    return (x + m - 1) // m * m


def _vmem_budget_bytes():
    """Half of physical VMEM, capped at 64 MiB (v5e/v6e: 64 MiB, v7x: 32 MiB)."""
    try:
        cap = pltpu.get_tpu_info().vmem_capacity_bytes
        return int(min(cap // 2, 64 * 1024 * 1024))
    except Exception:
        return 32 * 1024 * 1024  # safe everywhere (v7x physical VMEM is 64 MiB)


def _choose_pack(cin4, cout4):
    """Patches packed per row so both HBM streams get a lane-dense (%128) last dim."""
    p = 1
    while p <= 64 and ((cin4 * p) % 128 or (cout4 * p) % 128):
        p *= 2
    if (cin4 * p) % 128 == 0 and (cout4 * p) % 128 == 0:
        return p
    return 1  # fall back to unpacked (still correct, just lane-sparse)


# -----------------------------------------------------------------------------
# Pass 1: per-tile partial sum / sum-of-squares of the (bias-free) conv_down
# output.  Each grid step writes its own output row => "parallel" grid axis,
# no resident accumulator (v7x megacore friendly, no cross-core race).
# -----------------------------------------------------------------------------
def _stats_kernel(xp_ref, wd_ref, sum_ref, ssq_ref):
    y = jnp.dot(xp_ref[...], wd_ref[...], preferred_element_type=jnp.float32)
    sum_ref[...] = jnp.sum(y, axis=0, keepdims=True)
    ssq_ref[...] = jnp.sum(y * y, axis=0, keepdims=True)


# -----------------------------------------------------------------------------
# Pass 2: fused conv_down -> folded-BN affine -> ReLU -> conv_up on a row tile.
# -----------------------------------------------------------------------------
def _sieve_kernel(xp_ref, wd_ref, scale_ref, shift_ref, wu_ref, bu_ref, out_ref):
    y = jnp.dot(xp_ref[...], wd_ref[...], preferred_element_type=jnp.float32)
    z = jnp.maximum(y * scale_ref[...] + shift_ref[...], 0.0)
    out = jnp.dot(z, wu_ref[...], preferred_element_type=jnp.float32) + bu_ref[...]
    out_ref[...] = out.astype(out_ref.dtype)


def mask_features_sieve(x, w_down, b_down, gamma, beta, w_up, b_up,
                        *, stream_dtype=jnp.bfloat16, tile_rows=8192):
    """Forward pass of MaskFeaturesSieve.  x: (N, Cin, H, W) float32 NCHW.

    stream_dtype controls the dtype of the large HBM activation streams only
    (bf16 by default on every TPU generation -- the kernel is HBM-bound on all
    of them); weights, matmul accumulation and BN math stay in float32.
    """
    # b_down cancels exactly under train-mode BatchNorm (the batch mean contains
    # it), so it never has to enter the kernels at all.
    del b_down

    N, Cin, H, W = x.shape
    Cmid = w_down.shape[0]          # Conv2d weight:        (Cmid, Cin, 2, 2)
    Cout = w_up.shape[1]            # ConvTranspose2d wgt:  (Cmid, Cout, 2, 2)
    Ho, Wo = H // 2, W // 2
    M = N * Ho * Wo
    cin4, cout4 = Cin * 4, Cout * 4

    PACK = _choose_pack(cin4, cout4)
    KIN, KOUT, C4 = cin4 * PACK, cout4 * PACK, Cmid * PACK
    itemsize = jnp.dtype(stream_dtype).itemsize

    # --- tile selection (VMEM-aware, sublane-packing-aware) ----------------------
    M4 = pl.cdiv(M, PACK)
    vmem_budget = _vmem_budget_bytes()
    sub = 16 if itemsize < 4 else 8                 # bf16 packs 2 rows / sublane
    per_row = (KIN + KOUT) * itemsize * 2           # double-buffered in+out blocks
    cap = max(sub, (vmem_budget // 2) // per_row)
    tile = max(sub, (min(tile_rows, cap) // sub) * sub)
    tile = min(tile, _round_up(M4, sub))
    M4p = _round_up(M4, tile)
    grid = (M4p // tile,)
    ntiles = grid[0]

    # --- NCHW -> packed patch matrix (single fused XLA transpose/pad/cast pass;
    #     allow_input_fusion below lets XLA pull it into the Pallas input DMA) ----
    xp = x.reshape(N, Cin, Ho, 2, Wo, 2).transpose(0, 2, 4, 1, 3, 5)
    xp = xp.reshape(M, cin4)
    n_pad = M4p * PACK - M                          # zero-padded patches
    if n_pad:
        xp = jnp.pad(xp, ((0, n_pad), (0, 0)))
    xp4 = xp.reshape(M4p, KIN).astype(stream_dtype)

    # --- parameters, packed (block-diagonal weights == per-patch matmuls),
    #     kept in f32 (tiny, VMEM-resident -> no bandwidth cost) ------------------
    wd = w_down.reshape(Cmid, cin4).T.astype(jnp.float32)   # (Cin*4, Cmid)
    wu = w_up.reshape(Cmid, cout4).astype(jnp.float32)      # (Cmid, Cout*4)
    eye = jnp.eye(PACK, dtype=jnp.float32)
    wd_bd = jnp.kron(eye, wd)                                # (KIN, C4)
    wu_bd = jnp.kron(eye, wu)                                # (C4, KOUT)
    bu4 = jnp.tile(jnp.repeat(b_up, 4), PACK).reshape(1, KOUT).astype(jnp.float32)

    # --- pass 1: BN batch statistics (per-tile partial sums, parallel grid) ------
    stats_cost = pl.CostEstimate(
        flops=2 * M4p * KIN * C4 + 3 * M4p * C4,
        transcendentals=0,
        bytes_accessed=M4p * KIN * itemsize + KIN * C4 * 4 + 2 * ntiles * C4 * 4)
    psum, pssq = pl.pallas_call(
        _stats_kernel,
        out_shape=(jax.ShapeDtypeStruct((ntiles, C4), jnp.float32),
                   jax.ShapeDtypeStruct((ntiles, C4), jnp.float32)),
        grid=grid,
        in_specs=[pl.BlockSpec((tile, KIN), lambda i: (i, 0)),
                  pl.BlockSpec((KIN, C4), lambda i: (0, 0))],
        out_specs=(pl.BlockSpec((1, C4), lambda i: (i, 0)),
                   pl.BlockSpec((1, C4), lambda i: (i, 0))),
        compiler_params=pltpu.CompilerParams(
            dimension_semantics=("parallel",),
            allow_input_fusion=[True, False],
            vmem_limit_bytes=vmem_budget),
        cost_estimate=stats_cost,
    )(xp4, wd_bd)

    # --- fold train-mode BatchNorm into a per-channel affine (tiny, plain JAX) ---
    # Zero-padded patches contribute exactly 0 to the bias-free sums, and the
    # conv bias cancels inside BN, so no corrections are needed.
    sum_c = psum.reshape(ntiles * PACK, Cmid).sum(axis=0)
    ssq_c = pssq.reshape(ntiles * PACK, Cmid).sum(axis=0)
    mean_nb = sum_c / M
    var = jnp.maximum(ssq_c / M - mean_nb * mean_nb, 0.0)  # biased var (torch train)
    scale = gamma * lax.rsqrt(var + BN_EPS)
    shift = beta - mean_nb * scale
    scale4 = jnp.tile(scale, PACK).reshape(1, C4).astype(jnp.float32)
    shift4 = jnp.tile(shift, PACK).reshape(1, C4).astype(jnp.float32)

    # --- pass 2: fused matmul -> BN affine -> ReLU -> matmul, tiled & pipelined --
    small = pl.BlockSpec((1, C4), lambda i: (0, 0))
    main_cost = pl.CostEstimate(
        flops=2 * M4p * (KIN * C4 + C4 * KOUT) + 4 * M4p * C4,
        transcendentals=0,
        bytes_accessed=M4p * (KIN + KOUT) * itemsize)
    out4 = pl.pallas_call(
        _sieve_kernel,
        out_shape=jax.ShapeDtypeStruct((M4p, KOUT), stream_dtype),
        grid=grid,
        in_specs=[pl.BlockSpec((tile, KIN), lambda i: (i, 0)),
                  pl.BlockSpec((KIN, C4), lambda i: (0, 0)),
                  small, small,
                  pl.BlockSpec((C4, KOUT), lambda i: (0, 0)),
                  pl.BlockSpec((1, KOUT), lambda i: (0, 0))],
        out_specs=pl.BlockSpec((tile, KOUT), lambda i: (i, 0)),
        compiler_params=pltpu.CompilerParams(
            dimension_semantics=("parallel",),
            allow_input_fusion=[True, False, False, False, False, False],
            vmem_limit_bytes=vmem_budget),
        cost_estimate=main_cost,
    )(xp4, wd_bd, scale4, shift4, wu_bd, bu4)

    # --- packed patch matrix -> NCHW (single fused XLA pass; see TODO above) -----
    out = out4.reshape(M4p * PACK, cout4)[:M].astype(jnp.float32)
    y = out.reshape(N, Ho, Wo, Cout, 2, 2).transpose(0, 3, 1, 4, 2, 5)
    return y.reshape(N, Cout, H, W)


# ---------------------------------------------------------------------------
# Deterministic parameter init (mirrors the module's __init__ init loop)
# ---------------------------------------------------------------------------
def kaiming_normal_fan_out(key, shape):
    fan_out = shape[0] * shape[2] * shape[3]
    std = (2.0 / fan_out) ** 0.5
    return std * jax.random.normal(key, shape, dtype=jnp.float32)


def reference_forward(x, w_down, b_down, gamma, beta, w_up, b_up):
    """Pure-JAX reference: real conv / direct transpose-conv formula, f32."""
    y = lax.conv_general_dilated(
        x, w_down, window_strides=(2, 2), padding="VALID",
        dimension_numbers=("NCHW", "OIHW", "NCHW"))
    y = y + b_down.reshape(1, -1, 1, 1)
    mean = jnp.mean(y, axis=(0, 2, 3), keepdims=True)
    var = jnp.mean((y - mean) ** 2, axis=(0, 2, 3), keepdims=True)
    y = (y - mean) / jnp.sqrt(var + BN_EPS)
    y = gamma.reshape(1, -1, 1, 1) * y + beta.reshape(1, -1, 1, 1)
    y = jnp.maximum(y, 0.0)
    N, _, Ho, Wo = y.shape
    Cout = w_up.shape[1]
    o = jnp.einsum("ncij,cokl->noikjl", y, w_up)            # (N,Cout,Ho,kh,Wo,kw)
    return o.reshape(N, Cout, Ho * 2, Wo * 2) + b_up.reshape(1, -1, 1, 1)


if __name__ == "__main__":
    # small shapes consistent with the module: num_feature_maps=8,
    # num_reduce_feature_maps=4, spatial 16x16, batch=2
    N, Cin, Cmid, H, W = 2, 8, 4, 16, 16

    key = jax.random.PRNGKey(0)
    kx, kwd, kwu = jax.random.split(key, 3)

    x = jax.random.normal(kx, (N, Cin, H, W), dtype=jnp.float32)

    # conv_down.weight kaiming fan_out, conv_down.bias = 0.01
    w_down = kaiming_normal_fan_out(kwd, (Cmid, Cin, 2, 2))
    b_down = jnp.full((Cmid,), 0.01, dtype=jnp.float32)
    # bn.weight default 1.0 (skipped by init loop), bn.bias = 0.01
    gamma = jnp.ones((Cmid,), dtype=jnp.float32)
    beta = jnp.full((Cmid,), 0.01, dtype=jnp.float32)
    # conv_up.weight kaiming fan_out, conv_up.bias = 0.01
    w_up = kaiming_normal_fan_out(kwu, (Cmid, Cin, 2, 2))
    b_up = jnp.full((Cin,), 0.01, dtype=jnp.float32)

    ref = reference_forward(x, w_down, b_down, gamma, beta, w_up, b_up)

    # f32 HBM streams: tight check against the dense reference.
    fwd_f32 = jax.jit(functools.partial(mask_features_sieve,
                                        stream_dtype=jnp.float32))
    out = jax.block_until_ready(fwd_f32(x, w_down, b_down, gamma, beta, w_up, b_up))
    assert out.shape == (N, Cin, H, W), out.shape
    err = float(jnp.max(jnp.abs(out - ref)))
    assert err < 2e-4, err

    # default path (bf16 HBM streams on every TPU generation): loose-tolerance check.
    fwd_bf16 = jax.jit(mask_features_sieve)
    out_bf16 = jax.block_until_ready(
        fwd_bf16(x, w_down, b_down, gamma, beta, w_up, b_up))
    err_bf16 = float(jnp.max(jnp.abs(out_bf16.astype(jnp.float32) - ref)))
    assert err_bf16 < 0.2, err_bf16

    print("KERNEL_OK")
</pallas_src>

<mosaic_0001>
module attributes {stable_mosaic.version = 11 : i64} {
  func.func @_stats_kernel(%arg0: i32, %arg1: memref<32x128xf32, #tpu.memory_space<vmem>>, %arg2: memref<128x16xf32, #tpu.memory_space<vmem>>, %arg3: memref<1x16xf32, #tpu.memory_space<vmem>>, %arg4: memref<1x16xf32, #tpu.memory_space<vmem>>) attributes {dimension_semantics = [#tpu.dimension_semantics<parallel>], iteration_bounds = array<i64: 1>, scalar_prefetch = 0 : i64, scratch_operands = 0 : i64, tpu.core_type = #tpu.core_type<tc>, window_params = [{transform_indices = @transform_0, window_bounds = array<i64: 32, 128>}, {pipeline_mode = #tpu.pipeline_mode<synchronous>, transform_indices = @transform_1, window_bounds = array<i64: 128, 16>}, {transform_indices = @transform_2, window_bounds = array<i64: 1, 16>}, {transform_indices = @transform_3, window_bounds = array<i64: 1, 16>}]} {
    %c0 = arith.constant 0 : index
    %c0_0 = arith.constant 0 : index
    %0 = vector.load %arg1[%c0, %c0_0] : memref<32x128xf32, #tpu.memory_space<vmem>>, vector<32x128xf32>
    %c0_1 = arith.constant 0 : index
    %c0_2 = arith.constant 0 : index
    %1 = vector.load %arg2[%c0_1, %c0_2] : memref<128x16xf32, #tpu.memory_space<vmem>>, vector<128x16xf32>
    %cst = arith.constant dense<0.000000e+00> : vector<32x16xf32>
    %2 = tpu.matmul %0, %1, %cst {dimension_numbers = #tpu.dot_dimension_numbers<[1], [0], [0], [1], [0, 0, 1, 1], [], []>} : vector<32x128xf32>, vector<128x16xf32>, vector<32x16xf32> -> vector<32x16xf32>
    %cst_3 = arith.constant dense<0.000000e+00> : vector<16xf32>
    %3 = vector.multi_reduction <add>, %2, %cst_3 [0] : vector<32x16xf32> to vector<16xf32>
    %4 = vector.shape_cast %3 : vector<16xf32> to vector<1x16xf32>
    %c0_4 = arith.constant 0 : index
    %c0_5 = arith.constant 0 : index
    %5 = vector.load %arg3[%c0_4, %c0_5] : memref<1x16xf32, #tpu.memory_space<vmem>>, vector<1x16xf32>
    tpu.vector_store %arg3[%c0_4, %c0_5], %4 {strides = array<i32>} : memref<1x16xf32, #tpu.memory_space<vmem>>, vector<1x16xf32>,
    %6 = arith.mulf %2, %2 : vector<32x16xf32>
    %cst_6 = arith.constant dense<0.000000e+00> : vector<16xf32>
    %7 = vector.multi_reduction <add>, %6, %cst_6 [0] : vector<32x16xf32> to vector<16xf32>
    %8 = vector.shape_cast %7 : vector<16xf32> to vector<1x16xf32>
    %c0_7 = arith.constant 0 : index
    %c0_8 = arith.constant 0 : index
    %9 = vector.load %arg4[%c0_7, %c0_8] : memref<1x16xf32, #tpu.memory_space<vmem>>, vector<1x16xf32>
    tpu.vector_store %arg4[%c0_7, %c0_8], %8 {strides = array<i32>} : memref<1x16xf32, #tpu.memory_space<vmem>>, vector<1x16xf32>,
    return
  }
  func.func @transform_0(%arg0: i32) -> (i32, i32) {
    %c0_i32 = arith.constant 0 : i32
    %c0_i32_0 = arith.constant 0 : i32
    return %arg0, %c0_i32 : i32, i32
  }
  func.func @transform_1(%arg0: i32) -> (i32, i32) {
    %c0_i32 = arith.constant 0 : i32
    %c0_i32_0 = arith.constant 0 : i32
    %c0_i32_1 = arith.constant 0 : i32
    return %c0_i32, %c0_i32_0 : i32, i32
  }
  func.func @transform_2(%arg0: i32) -> (i32, i32) {
    %c0_i32 = arith.constant 0 : i32
    %c0_i32_0 = arith.constant 0 : i32
    return %arg0, %c0_i32 : i32, i32
  }
  func.func @transform_3(%arg0: i32) -> (i32, i32) {
    %c0_i32 = arith.constant 0 : i32
    %c0_i32_0 = arith.constant 0 : i32
    return %arg0, %c0_i32 : i32, i32
  }
}

module attributes {stable_mosaic.version = 11 : i64} {
  func.func @_sieve_kernel(%arg0: i32, %arg1: memref<32x128xf32, #tpu.memory_space<vmem>>, %arg2: memref<128x16xf32, #tpu.memory_space<vmem>>, %arg3: memref<1x16xf32, #tpu.memory_space<vmem>>, %arg4: memref<1x16xf32, #tpu.memory_space<vmem>>, %arg5: memref<16x128xf32, #tpu.memory_space<vmem>>, %arg6: memref<1x128xf32, #tpu.memory_space<vmem>>, %arg7: memref<32x128xf32, #tpu.memory_space<vmem>>) attributes {dimension_semantics = [#tpu.dimension_semantics<parallel>], iteration_bounds = array<i64: 1>, scalar_prefetch = 0 : i64, scratch_operands = 0 : i64, tpu.core_type = #tpu.core_type<tc>, window_params = [{transform_indices = @transform_0, window_bounds = array<i64: 32, 128>}, {pipeline_mode = #tpu.pipeline_mode<synchronous>, transform_indices = @transform_1, window_bounds = array<i64: 128, 16>}, {pipeline_mode = #tpu.pipeline_mode<synchronous>, transform_indices = @transform_2, window_bounds = array<i64: 1, 16>}, {pipeline_mode = #tpu.pipeline_mode<synchronous>, transform_indices = @transform_3, window_bounds = array<i64: 1, 16>}, {pipeline_mode = #tpu.pipeline_mode<synchronous>, transform_indices = @transform_4, window_bounds = array<i64: 16, 128>}, {pipeline_mode = #tpu.pipeline_mode<synchronous>, transform_indices = @transform_5, window_bounds = array<i64: 1, 128>}, {transform_indices = @transform_6, window_bounds = array<i64: 32, 128>}]} {
    %c0 = arith.constant 0 : index
    %c0_0 = arith.constant 0 : index
    %0 = vector.load %arg1[%c0, %c0_0] : memref<32x128xf32, #tpu.memory_space<vmem>>, vector<32x128xf32>
    %c0_1 = arith.constant 0 : index
    %c0_2 = arith.constant 0 : index
    %1 = vector.load %arg2[%c0_1, %c0_2] : memref<128x16xf32, #tpu.memory_space<vmem>>, vector<128x16xf32>
    %cst = arith.constant dense<0.000000e+00> : vector<32x16xf32>
    %2 = tpu.matmul %0, %1, %cst {dimension_numbers = #tpu.dot_dimension_numbers<[1], [0], [0], [1], [0, 0, 1, 1], [], []>} : vector<32x128xf32>, vector<128x16xf32>, vector<32x16xf32> -> vector<32x16xf32>
    %c0_3 = arith.constant 0 : index
    %c0_4 = arith.constant 0 : index
    %3 = vector.load %arg3[%c0_3, %c0_4] : memref<1x16xf32, #tpu.memory_space<vmem>>, vector<1x16xf32>
    %4 = vector.broadcast %3 : vector<1x16xf32> to vector<32x16xf32>
    %5 = arith.mulf %2, %4 : vector<32x16xf32>
    %c0_5 = arith.constant 0 : index
    %c0_6 = arith.constant 0 : index
    %6 = vector.load %arg4[%c0_5, %c0_6] : memref<1x16xf32, #tpu.memory_space<vmem>>, vector<1x16xf32>
    %7 = vector.broadcast %6 : vector<1x16xf32> to vector<32x16xf32>
    %8 = arith.addf %5, %7 : vector<32x16xf32>
    %cst_7 = arith.constant 0.000000e+00 : f32
    %9 = vector.broadcast %cst_7 : f32 to vector<32x16xf32>
    %10 = arith.maximumf %8, %9 : vector<32x16xf32>
    %c0_8 = arith.constant 0 : index
    %c0_9 = arith.constant 0 : index
    %11 = vector.load %arg5[%c0_8, %c0_9] : memref<16x128xf32, #tpu.memory_space<vmem>>, vector<16x128xf32>
    %cst_10 = arith.constant dense<0.000000e+00> : vector<32x128xf32>
    %12 = tpu.matmul %10, %11, %cst_10 {dimension_numbers = #tpu.dot_dimension_numbers<[1], [0], [0], [1], [0, 0, 1, 1], [], []>} : vector<32x16xf32>, vector<16x128xf32>, vector<32x128xf32> -> vector<32x128xf32>
    %c0_11 = arith.constant 0 : index
    %c0_12 = arith.constant 0 : index
    %13 = vector.load %arg6[%c0_11, %c0_12] : memref<1x128xf32, #tpu.memory_space<vmem>>, vector<1x128xf32>
    %14 = vector.broadcast %13 : vector<1x128xf32> to vector<32x128xf32>
    %15 = arith.addf %12, %14 : vector<32x128xf32>
    %c0_13 = arith.constant 0 : index
    %c0_14 = arith.constant 0 : index
    %16 = vector.load %arg7[%c0_13, %c0_14] : memref<32x128xf32, #tpu.memory_space<vmem>>, vector<32x128xf32>
    tpu.vector_store %arg7[%c0_13, %c0_14], %15 {strides = array<i32>} : memref<32x128xf32, #tpu.memory_space<vmem>>, vector<32x128xf32>,
    return
  }
  func.func @transform_0(%arg0: i32) -> (i32, i32) {
    %c0_i32 = arith.constant 0 : i32
    %c0_i32_0 = arith.constant 0 : i32
    return %arg0, %c0_i32 : i32, i32
  }
  func.func @transform_1(%arg0: i32) -> (i32, i32) {
    %c0_i32 = arith.constant 0 : i32
    %c0_i32_0 = arith.constant 0 : i32
    %c0_i32_1 = arith.constant 0 : i32
    return %c0_i32, %c0_i32_0 : i32, i32
  }
  func.func @transform_2(%arg0: i32) -> (i32, i32) {
    %c0_i32 = arith.constant 0 : i32
    %c0_i32_0 = arith.constant 0 : i32
    %c0_i32_1 = arith.constant 0 : i32
    return %c0_i32, %c0_i32_0 : i32, i32
  }
  func.func @transform_3(%arg0: i32) -> (i32, i32) {
    %c0_i32 = arith.constant 0 : i32
    %c0_i32_0 = arith.constant 0 : i32
    %c0_i32_1 = arith.constant 0 : i32
    return %c0_i32, %c0_i32_0 : i32, i32
  }
  func.func @transform_4(%arg0: i32) -> (i32, i32) {
    %c0_i32 = arith.constant 0 : i32
    %c0_i32_0 = arith.constant 0 : i32
    %c0_i32_1 = arith.constant 0 : i32
    return %c0_i32, %c0_i32_0 : i32, i32
  }
  func.func @transform_5(%arg0: i32) -> (i32, i32) {
    %c0_i32 = arith.constant 0 : i32
    %c0_i32_0 = arith.constant 0 : i32
    %c0_i32_1 = arith.constant 0 : i32
    return %c0_i32, %c0_i32_0 : i32, i32
  }
  func.func @transform_6(%arg0: i32) -> (i32, i32) {
    %c0_i32 = arith.constant 0 : i32
    %c0_i32_0 = arith.constant 0 : i32
    return %arg0, %c0_i32 : i32, i32
  }
}

</mosaic_0001>

<llo_original>
// kernel: tile.21
$region0: #{tile.21}
  #allocation0 [shape = 's32[1]{0}', space=sflag, size = 0x4, scoped, tag = 'scoped memory for tile.21']
  %s0 = inlined_call_operand.vmem [shape: f32[4], index: 0, kind: input, shape index: {}]
  %s1 = inlined_call_operand.vmem [shape: f32[4,4], index: 1, kind: output, shape index: {}]
  // Predicated region
  $region2: #{tile.21} parent=0 // pred_check
    _
  $region3: #{tile.21} parent=0 // pred_check_branch
    %3 = sbr.rel (0) target = $region5
  $region4: #{tile.21} parent=0 // pred_region
    _
  $region5: #{tile.21} parent=0 // pred_fallthru
    _
  %v4 = vld [vmem:[%s0] ss:$0 sm:$0xff]
  %5 = vst [vmem:[%s1] sm:$0xf] %v4

// kernel: tile.22
$region0: #{tile.22}
  %s0 = inlined_call_operand.vmem [shape: f32[4,4], index: 0, kind: input, shape index: {}]
  %s1 = inlined_call_operand.vmem [shape: f32[1,16], index: 1, kind: output, shape index: {}]
  $region1: #{tile.22} parent=0
    #allocation0 [shape = 'u8[4096]{0}', space=vmem, size = 0x1000, scoped, tag = 'scoped mem for output reshape']
    #allocation1 [shape = 'u8[4096]{0}', space=vmem, size = 0x1000, scoped, tag = 'scoped mem for input reshape']
    %s3 = sshllo.u32 0, 4
    %v4 = vld [vmem:[%s0] sm:%s3]
    %5 = vst [vmem:[#allocation1] sm:%s3] %v4
    %v6 = vld [vmem:[#allocation1] sm:$0x1]
    %vm7 = vcmask 31744
    %8 = vst.msk [vmem:[#allocation0] sm:$0x1] %vm7, %v6
    %s9 = scalar_lea.vmem [#allocation1], 3
    %v10 = vld [vmem:[%s9] sm:$0x1]
    %11 = vrot.lane.b32.xlu0 %v10, 12
    %v12 = vpop.permute.xlu0 %11
    %vm13 = vcmask 130144
    %14 = vst.msk [vmem:[#allocation0] sm:$0x1] %vm13, %v12
    %s15 = scalar_lea.vmem [#allocation1], 2
    %v16 = vld [vmem:[%s15] sm:$0x1]
    %17 = vrot.lane.b32.xlu0 %v16, 8
    %v18 = vpop.permute.xlu0 %17
    %vm19 = vcmask 97344
    %20 = vst.msk [vmem:[#allocation0] sm:$0x1] %vm19, %v18
    %s21 = scalar_lea.vmem [#allocation1], 1
    %v22 = vld [vmem:[%s21] sm:$0x1]
    %23 = vrot.lane.b32.xlu0 %v22, 4
    %v24 = vpop.permute.xlu0 %23
    %vm25 = vcmask 64544
    %26 = vst.msk [vmem:[#allocation0] sm:$0x1] %vm25, %v24
    %s28 = sshllo.u32 0, 1
    %v30 = vld [vmem:[#allocation0] sm:%s28]
    %s31 = sshllo.u32 0, 1
    %32 = vst [vmem:[%s1] sm:%s31] %v30

// kernel: tile.15
$region0: #{tile.15}
  %s0 = inlined_call_operand.vmem [shape: f32[8,4], index: 0, kind: input, shape index: {}]
  %s1 = inlined_call_operand.vmem [shape: f32[32], index: 1, kind: output, shape index: {}]
  $region1: #{tile.15} parent=0
    #allocation0 [shape = 'u8[4096]{0}', space=vmem, size = 0x1000, scoped, tag = 'scoped mem for output reshape']
    %v2 = vld [vmem:[%s0] sm:$0x1]
    %vm3 = vcmask 31744
    %4 = vst.msk [vmem:[#allocation0] sm:$0x1] %vm3, %v2
    %s5 = scalar_lea.vmem %s0, 7
    %v6 = vld [vmem:[%s5] sm:$0x1]
    %7 = vrot.lane.b32.xlu0 %v6, 28
    %v8 = vpop.permute.xlu0 %7
    %vm9 = vcmask 261344
    %10 = vst.msk [vmem:[#allocation0] sm:$0x1] %vm9, %v8
    %s11 = scalar_lea.vmem %s0, 6
    %v12 = vld [vmem:[%s11] sm:$0x1]
    %13 = vrot.lane.b32.xlu0 %v12, 24
    %v14 = vpop.permute.xlu0 %13
    %vm15 = vcmask 228544
    %16 = vst.msk [vmem:[#allocation0] sm:$0x1] %vm15, %v14
    %s17 = scalar_lea.vmem %s0, 5
    %v18 = vld [vmem:[%s17] sm:$0x1]
    %19 = vrot.lane.b32.xlu0 %v18, 20
    %v20 = vpop.permute.xlu0 %19
    %vm21 = vcmask 195744
    %22 = vst.msk [vmem:[#allocation0] sm:$0x1] %vm21, %v20
    %s23 = scalar_lea.vmem %s0, 4
    %v24 = vld [vmem:[%s23] sm:$0x1]
    %25 = vrot.lane.b32.xlu0 %v24, 16
    %v26 = vpop.permute.xlu0 %25
    %vm27 = vcmask 162944
    %28 = vst.msk [vmem:[#allocation0] sm:$0x1] %vm27, %v26
    %s29 = scalar_lea.vmem %s0, 3
    %v30 = vld [vmem:[%s29] sm:$0x1]
    %31 = vrot.lane.b32.xlu0 %v30, 12
    %v32 = vpop.permute.xlu0 %31
    %vm33 = vcmask 130144
    %34 = vst.msk [vmem:[#allocation0] sm:$0x1] %vm33, %v32
    %s35 = scalar_lea.vmem %s0, 2
    %v36 = vld [vmem:[%s35] sm:$0x1]
    %37 = vrot.lane.b32.xlu0 %v36, 8
    %v38 = vpop.permute.xlu0 %37
    %vm39 = vcmask 97344
    %40 = vst.msk [vmem:[#allocation0] sm:$0x1] %vm39, %v38
    %s41 = scalar_lea.vmem %s0, 1
    %v42 = vld [vmem:[%s41] sm:$0x1]
    %43 = vrot.lane.b32.xlu0 %v42, 4
    %v44 = vpop.permute.xlu0 %43
    %vm45 = vcmask 64544
    %46 = vst.msk [vmem:[#allocation0] sm:$0x1] %vm45, %v44
    %s48 = sshllo.u32 0, 1
    %v50 = vld [vmem:[#allocation0] sm:%s48]
    %s51 = sshllo.u32 0, 1
    %52 = vst [vmem:[%s1] sm:%s51] %v50

// kernel: tile.16
$region0: #{tile.16}
  #allocation0 [shape = 's32[1]{0}', space=sflag, size = 0x4, scoped, tag = 'scoped memory for tile.16']
  %s0 = inlined_call_operand.vmem [shape: f32[32], index: 0, kind: input, shape index: {}]
  %s1 = inlined_call_operand.vmem [shape: f32[4,32], index: 1, kind: output, shape index: {}]
  // Predicated region
  $region2: #{tile.16} parent=0 // pred_check
    _
  $region3: #{tile.16} parent=0 // pred_check_branch
    %3 = sbr.rel (0) target = $region5
  $region4: #{tile.16} parent=0 // pred_region
    _
  $region5: #{tile.16} parent=0 // pred_fallthru
    _
  %v4 = vld [vmem:[%s0] ss:$0 sm:$0xff]
  %5 = vst [vmem:[%s1] sm:$0xf] %v4

// kernel: tile.17
$region0: #{tile.17}
  %s0 = inlined_call_operand.vmem [shape: f32[4,32], index: 0, kind: input, shape index: {}]
  %s1 = inlined_call_operand.vmem [shape: f32[1,128], index: 1, kind: output, shape index: {}]
  $region1: #{tile.17} parent=0
    #allocation0 [shape = 'u8[4096]{0}', space=vmem, size = 0x1000, scoped, tag = 'scoped mem for output reshape']
    #allocation1 [shape = 'u8[4096]{0}', space=vmem, size = 0x1000, scoped, tag = 'scoped mem for input reshape']
    %s3 = sshllo.u32 0, 4
    %v4 = vld [vmem:[%s0] sm:%s3]
    %5 = vst [vmem:[#allocation1] sm:%s3] %v4
    %v6 = vld [vmem:[#allocation1] sm:$0x1]
    %vm7 = vcmask 261120
    %8 = vst.msk [vmem:[#allocation0] sm:$0x1] %vm7, %v6
    %s9 = scalar_lea.vmem [#allocation1], 3
    %v10 = vld [vmem:[%s9] sm:$0x1]
    %11 = vrot.lane.b32.xlu0 %v10, 96
    %v12 = vpop.permute.xlu0 %11
    %vm13 = vcmask 1048320
    %14 = vst.msk [vmem:[#allocation0] sm:$0x1] %vm13, %v12
    %s15 = scalar_lea.vmem [#allocation1], 2
    %v16 = vld [vmem:[%s15] sm:$0x1]
    %17 = vrot.lane.b32.xlu0 %v16, 64
    %v18 = vpop.permute.xlu0 %17
    %vm19 = vcmask 785920
    %20 = vst.msk [vmem:[#allocation0] sm:$0x1] %vm19, %v18
    %s21 = scalar_lea.vmem [#allocation1], 1
    %v22 = vld [vmem:[%s21] sm:$0x1]
    %23 = vrot.lane.b32.xlu0 %v22, 32
    %v24 = vpop.permute.xlu0 %23
    %vm25 = vcmask 523520
    %26 = vst.msk [vmem:[#allocation0] sm:$0x1] %vm25, %v24
    %s28 = sshllo.u32 0, 1
    %v30 = vld [vmem:[#allocation0] sm:%s28]
    %s31 = sshllo.u32 0, 1
    %32 = vst [vmem:[%s1] sm:%s31] %v30

// kernel: mask_features_sieve.2
$region0: #{mask_features_sieve.2}
  #allocation0 [shape = 'u32[]', space=smem, size = 0x4, offset = 0x4, fixed_abs, tag = 'smem constant byte address 0x4 - core index']
  #allocation1 [shape = 'u32[144,128]{1,0:T(1,128)}', space=vmem, size = 0x12000, scoped, tag = 'internal scratch']
  %s0 = inlined_call_operand.vmem [shape: f32[32,128], index: 0, kind: input, shape index: {}]
  %s1 = inlined_call_operand.vmem [shape: f32[128,16], index: 1, kind: input, shape index: {}]
  %s2 = inlined_call_operand.vmem [shape: f32[1,16], index: 2, kind: output, shape index: {0}]
  %s3 = inlined_call_operand.vmem [shape: f32[1,16], index: 3, kind: output, shape index: {1}]
  %4 = xla_tuple %s2, %s3
  %s5 = sld [smem:[#allocation0]]
  $region26: #{mask_features_sieve.2} parent=0
    _
  %s7 = ssub.s32 1, %s5
  %s8 = scalar_select 0, %s7, %s5
  // Predicated region
  $region2: #{mask_features_sieve.2} parent=0 // pred_check
    _
  $region3: #{mask_features_sieve.2} parent=0 // pred_check_branch
    %10 = sbr.rel (0) target = $region5
  $region4: #{mask_features_sieve.2} parent=0 // pred_region
    _
  $region5: #{mask_features_sieve.2} parent=0 // pred_fallthru
    _
  // Predicated region
  $region6: #{mask_features_sieve.2} parent=0 // pred_check
    _
  $region7: #{mask_features_sieve.2} parent=0 // pred_check_branch
    %12 = sbr.rel (0) target = $region9
  $region8: #{mask_features_sieve.2} parent=0 // pred_region
    _
  $region9: #{mask_features_sieve.2} parent=0 // pred_fallthru
    _
  %v13 = vld [vmem:[%s0] sm:$0xff]
  %v14 = vld [vmem:[%s0 + $0x8] sm:$0xff]
  %v15 = vld [vmem:[%s0 + $0x10] sm:$0xff]
  %v16 = vld [vmem:[%s0 + $0x18] sm:$0xff]
  %v17 = vld [vmem:[%s1] sm:$0xff]
  %v18 = vld [vmem:[%s1 + $0x8] sm:$0xff]
  %v19 = vld [vmem:[%s1 + $0x10] sm:$0xff]
  %v20 = vld [vmem:[%s1 + $0x18] sm:$0xff]
  %v21 = vld [vmem:[%s1 + $0x20] sm:$0xff]
  %v22 = vld [vmem:[%s1 + $0x28] sm:$0xff]
  %v23 = vld [vmem:[%s1 + $0x30] sm:$0xff]
  %v24 = vld [vmem:[%s1 + $0x38] sm:$0xff]
  %v25 = vld [vmem:[%s1 + $0x40] sm:$0xff]
  %v26 = vld [vmem:[%s1 + $0x48] sm:$0xff]
  %v27 = vld [vmem:[%s1 + $0x50] sm:$0xff]
  %v28 = vld [vmem:[%s1 + $0x58] sm:$0xff]
  %v29 = vld [vmem:[%s1 + $0x60] sm:$0xff]
  %v30 = vld [vmem:[%s1 + $0x68] sm:$0xff]
  %v31 = vld [vmem:[%s1 + $0x70] sm:$0xff]
  %v32 = vld [vmem:[%s1 + $0x78] sm:$0xff]
  %33 = vmatprep.subr.mxu0 0.0
  %34 = vmatpush1.msra.mxu0 %v17
  %35 = vmatprep.subr.mxu0 0.0
  %36 = vmatpush1.msra.mxu0 %v18
  %37 = vmatprep.subr.mxu0 0.0
  %38 = vmatpush1.msra.mxu0 %v19
  %39 = vmatprep.subr.mxu0 0.0
  %40 = vmatpush1.msra.mxu0 %v20
  %41 = vmatprep.subr.mxu0 0.0
  %42 = vmatpush1.msra.mxu0 %v21
  %43 = vmatprep.subr.mxu0 0.0
  %44 = vmatpush1.msra.mxu0 %v22
  %45 = vmatprep.subr.mxu0 0.0
  %46 = vmatpush1.msra.mxu0 %v23
  %47 = vmatprep.subr.mxu0 0.0
  %48 = vmatpush1.msra.mxu0 %v24
  %49 = vmatprep.subr.mxu0 0.0
  %50 = vmatpush1.msra.mxu0 %v25
  %51 = vmatprep.subr.mxu0 0.0
  %52 = vmatpush1.msra.mxu0 %v26
  %53 = vmatprep.subr.mxu0 0.0
  %54 = vmatpush1.msra.mxu0 %v27
  %55 = vmatprep.subr.mxu0 0.0
  %56 = vmatpush1.msra.mxu0 %v28
  %57 = vmatprep.subr.mxu0 0.0
  %58 = vmatpush1.msra.mxu0 %v29
  %59 = vmatprep.subr.mxu0 0.0
  %60 = vmatpush1.msra.mxu0 %v30
  %61 = vmatprep.subr.mxu0 0.0
  %62 = vmatpush1.msra.mxu0 %v31
  %63 = vmatprep.subr.mxu0 0.0
  %64 = vmatpush1.msra.mxu0 %v32
  %65 = vmatprep.subr.mxu0 0.0
  %66 = vmatpush1.msra.mxu0 0.0
  %67 = vmatprep.subr.mxu0 0.0
  %68 = vmatpush1.msra.mxu0 0.0
  %69 = vmatprep.subr.mxu0 0.0
  %70 = vmatpush1.msra.mxu0 0.0
  %71 = vmatprep.subr.mxu0 0.0
  %72 = vmatpush1.msra.mxu0 0.0
  %73 = vmatprep.subr.mxu0 0.0
  %74 = vmatpush1.msra.mxu0 0.0
  %75 = vmatprep.subr.mxu0 0.0
  %76 = vmatpush1.msra.mxu0 0.0
  %77 = vmatprep.subr.mxu0 0.0
  %78 = vmatpush1.msra.mxu0 0.0
  %79 = vmatprep.subr.mxu0 0.0
  %80 = vmatpush1.msra.mxu0 0.0
  %81 = vmatprep.subr.mxu0 0.0
  %82 = vmatpush1.msra.mxu0 0.0
  %83 = vmatprep.subr.mxu0 0.0
  %84 = vmatpush1.msra.mxu0 0.0
  %85 = vmatprep.subr.mxu0 0.0
  %86 = vmatpush1.msra.mxu0 0.0
  %87 = vmatprep.subr.mxu0 0.0
  %88 = vmatpush1.msra.mxu0 0.0
  %89 = vmatprep.subr.mxu0 0.0
  %90 = vmatpush1.msra.mxu0 0.0
  %91 = vmatprep.subr.mxu0 0.0
  %92 = vmatpush1.msra.mxu0 0.0
  %93 = vmatprep.subr.mxu0 0.0
  %94 = vmatpush1.msra.mxu0 0.0
  %95 = vmatprep.subr.mxu0 0.0
  %96 = vmatpush1.msra.mxu0 0.0
  %97 = vmatprep.mubr.f32.mxu0 0.0
  %98 = vmatmul.mubr.f32.gmra.mrb[0].mxu0 %v13
  %v99 = vpop.f32.mrb[0].mxu0
  %v100 = vadd.f32 0.0, %v99
  %v101 = vpop.f32.mrb[0].mxu0
  %102 = vmatprep.mubr.f32.mxu0 0.0
  %103 = vmatmul.mubr.f32.gmra.mrb[0].mxu0 %v14
  %v104 = vpop.f32.mrb[0].mxu0
  %v105 = vadd.f32 0.0, %v104
  %v106 = vpop.f32.mrb[0].mxu0
  %107 = vmatprep.mubr.f32.mxu0 0.0
  %108 = vmatmul.mubr.f32.gmra.mrb[0].mxu0 %v15
  %v109 = vpop.f32.mrb[0].mxu0
  %v110 = vadd.f32 0.0, %v109
  %v111 = vpop.f32.mrb[0].mxu0
  %112 = vmatprep.mubr.f32.mxu0 0.0
  %113 = vmatmul.mubr.f32.gmra.mrb[0].mxu0 %v16
  %v114 = vpop.f32.mrb[0].mxu0
  %v115 = vadd.f32 0.0, %v114
  %v116 = vpop.f32.mrb[0].mxu0
  %117 = vdwg.mxu0
  %vm118 = vcmask 130048
  %v119 = vsel %vm118, %v100, 0.0
  %v120 = vsel %vm118, %v105, 0.0
  %v121 = vadd.f32 %v119, %v120
  %v122 = vsel %vm118, %v110, 0.0
  %v123 = vadd.f32 %v121, %v122
  %v124 = vsel %vm118, %v115, 0.0
  %v125 = vadd.f32 %v123, %v124
  %v126 = vrot.slane %v125, 4
  %v127 = vadd.f32 %v125, %v126
  %v128 = vrot.slane %v127, 2
  %v129 = vadd.f32 %v127, %v128
  %v130 = vrot.slane %v129, 1
  %v131 = vadd.f32 %v129, %v130
  %vm132 = vcmask 122880
  %133 = vst.msk [vmem:[%s2] sm:$0x1] %vm132, %v131
  %v134 = vmul.f32 %v100, %v100
  %v135 = vmul.f32 %v105, %v105
  %v136 = vmul.f32 %v110, %v110
  %v137 = vmul.f32 %v115, %v115
  %v138 = vsel %vm118, %v134, 0.0
  %v139 = vsel %vm118, %v135, 0.0
  %v140 = vadd.f32 %v138, %v139
  %v141 = vsel %vm118, %v136, 0.0
  %v142 = vadd.f32 %v140, %v141
  %v143 = vsel %vm118, %v137, 0.0
  %v144 = vadd.f32 %v142, %v143
  %v145 = vrot.slane %v144, 4
  %v146 = vadd.f32 %v144, %v145
  %v147 = vrot.slane %v146, 2
  %v148 = vadd.f32 %v146, %v147
  %v149 = vrot.slane %v148, 1
  %v150 = vadd.f32 %v148, %v149
  %151 = vst.msk [vmem:[%s3] sm:$0x1] %vm132, %v150
  // Predicated region
  $region10: #{mask_features_sieve.2} parent=0 // pred_check
    _
  $region11: #{mask_features_sieve.2} parent=0 // pred_check_branch
    %153 = sbr.rel (0) target = $region13
  $region12: #{mask_features_sieve.2} parent=0 // pred_region
    _
  $region13: #{mask_features_sieve.2} parent=0 // pred_fallthru
    _
  // Predicated region
  $region14: #{mask_features_sieve.2} parent=0 // pred_check
    _
  $region15: #{mask_features_sieve.2} parent=0 // pred_check_branch
    %155 = sbr.rel (0) target = $region17
  $region16: #{mask_features_sieve.2} parent=0 // pred_region
    _
  $region17: #{mask_features_sieve.2} parent=0 // pred_fallthru
    _
  // Predicated region
  $region18: #{mask_features_sieve.2} parent=0 // pred_check
    _
  $region19: #{mask_features_sieve.2} parent=0 // pred_check_branch
    %157 = sbr.rel (0) target = $region21
  $region20: #{mask_features_sieve.2} parent=0 // pred_region
    _
  $region21: #{mask_features_sieve.2} parent=0 // pred_fallthru
    _
  // Predicated region
  $region22: #{mask_features_sieve.2} parent=0 // pred_check
    _
  $region23: #{mask_features_sieve.2} parent=0 // pred_check_branch
    %159 = sbr.rel (0) target = $region25
  $region24: #{mask_features_sieve.2} parent=0 // pred_region
    _
  $region25: #{mask_features_sieve.2} parent=0 // pred_fallthru
    _

// kernel: mask_features_sieve.3
$region0: #{mask_features_sieve.3}
  #allocation0 [shape = 'u32[]', space=smem, size = 0x4, offset = 0x4, fixed_abs, tag = 'smem constant byte address 0x4 - core index']
  #allocation1 [shape = 'u32[144,128]{1,0:T(1,128)}', space=vmem, size = 0x12000, scoped, tag = 'internal scratch']
  %s0 = inlined_call_operand.vmem [shape: f32[32,128], index: 0, kind: input, shape index: {}]
  %s1 = inlined_call_operand.vmem [shape: f32[128,16], index: 1, kind: input, shape index: {}]
  %s2 = inlined_call_operand.vmem [shape: f32[1,16], index: 2, kind: input, shape index: {}]
  %s3 = inlined_call_operand.vmem [shape: f32[1,16], index: 3, kind: input, shape index: {}]
  %s4 = inlined_call_operand.vmem [shape: f32[16,128], index: 4, kind: input, shape index: {}]
  %s5 = inlined_call_operand.vmem [shape: f32[1,128], index: 5, kind: input, shape index: {}]
  %s6 = inlined_call_operand.vmem [shape: f32[32,128], index: 6, kind: output, shape index: {}]
  %s7 = sld [smem:[#allocation0]]
  $region34: #{mask_features_sieve.3} parent=0
    _
  %s9 = ssub.s32 1, %s7
  %s10 = scalar_select 0, %s9, %s7
  // Predicated region
  $region2: #{mask_features_sieve.3} parent=0 // pred_check
    _
  $region3: #{mask_features_sieve.3} parent=0 // pred_check_branch
    %12 = sbr.rel (0) target = $region5
  $region4: #{mask_features_sieve.3} parent=0 // pred_region
    _
  $region5: #{mask_features_sieve.3} parent=0 // pred_fallthru
    _
  // Predicated region
  $region6: #{mask_features_sieve.3} parent=0 // pred_check
    _
  $region7: #{mask_features_sieve.3} parent=0 // pred_check_branch
    %14 = sbr.rel (0) target = $region9
  $region8: #{mask_features_sieve.3} parent=0 // pred_region
    _
  $region9: #{mask_features_sieve.3} parent=0 // pred_fallthru
    _
  // Predicated region
  $region10: #{mask_features_sieve.3} parent=0 // pred_check
    _
  $region11: #{mask_features_sieve.3} parent=0 // pred_check_branch
    %16 = sbr.rel (0) target = $region13
  $region12: #{mask_features_sieve.3} parent=0 // pred_region
    _
  $region13: #{mask_features_sieve.3} parent=0 // pred_fallthru
    _
  // Predicated region
  $region14: #{mask_features_sieve.3} parent=0 // pred_check
    _
  $region15: #{mask_features_sieve.3} parent=0 // pred_check_branch
    %18 = sbr.rel (0) target = $region17
  $region16: #{mask_features_sieve.3} parent=0 // pred_region
    _
  $region17: #{mask_features_sieve.3} parent=0 // pred_fallthru
    _
  // Predicated region
  $region18: #{mask_features_sieve.3} parent=0 // pred_check
    _
  $region19: #{mask_features_sieve.3} parent=0 // pred_check_branch
    %20 = sbr.rel (0) target = $region21
  $region20: #{mask_features_sieve.3} parent=0 // pred_region
    _
  $region21: #{mask_features_sieve.3} parent=0 // pred_fallthru
    _
  // Predicated region
  $region22: #{mask_features_sieve.3} parent=0 // pred_check
    _
  $region23: #{mask_features_sieve.3} parent=0 // pred_check_branch
    %22 = sbr.rel (0) target = $region25
  $region24: #{mask_features_sieve.3} parent=0 // pred_region
    _
  $region25: #{mask_features_sieve.3} parent=0 // pred_fallthru
    _
  %v23 = vld [vmem:[%s0] sm:$0xff]
  %v24 = vld [vmem:[%s0 + $0x8] sm:$0xff]
  %v25 = vld [vmem:[%s0 + $0x10] sm:$0xff]
  %v26 = vld [vmem:[%s0 + $0x18] sm:$0xff]
  %v27 = vld [vmem:[%s1] sm:$0xff]
  %v28 = vld [vmem:[%s1 + $0x8] sm:$0xff]
  %v29 = vld [vmem:[%s1 + $0x10] sm:$0xff]
  %v30 = vld [vmem:[%s1 + $0x18] sm:$0xff]
  %v31 = vld [vmem:[%s1 + $0x20] sm:$0xff]
  %v32 = vld [vmem:[%s1 + $0x28] sm:$0xff]
  %v33 = vld [vmem:[%s1 + $0x30] sm:$0xff]
  %v34 = vld [vmem:[%s1 + $0x38] sm:$0xff]
  %v35 = vld [vmem:[%s1 + $0x40] sm:$0xff]
  %v36 = vld [vmem:[%s1 + $0x48] sm:$0xff]
  %v37 = vld [vmem:[%s1 + $0x50] sm:$0xff]
  %v38 = vld [vmem:[%s1 + $0x58] sm:$0xff]
  %v39 = vld [vmem:[%s1 + $0x60] sm:$0xff]
  %v40 = vld [vmem:[%s1 + $0x68] sm:$0xff]
  %v41 = vld [vmem:[%s1 + $0x70] sm:$0xff]
  %v42 = vld [vmem:[%s1 + $0x78] sm:$0xff]
  %43 = vmatprep.subr.mxu0 0.0
  %44 = vmatpush1.msra.mxu0 %v27
  %45 = vmatprep.subr.mxu0 0.0
  %46 = vmatpush1.msra.mxu0 %v28
  %47 = vmatprep.subr.mxu0 0.0
  %48 = vmatpush1.msra.mxu0 %v29
  %49 = vmatprep.subr.mxu0 0.0
  %50 = vmatpush1.msra.mxu0 %v30
  %51 = vmatprep.subr.mxu0 0.0
  %52 = vmatpush1.msra.mxu0 %v31
  %53 = vmatprep.subr.mxu0 0.0
  %54 = vmatpush1.msra.mxu0 %v32
  %55 = vmatprep.subr.mxu0 0.0
  %56 = vmatpush1.msra.mxu0 %v33
  %57 = vmatprep.subr.mxu0 0.0
  %58 = vmatpush1.msra.mxu0 %v34
  %59 = vmatprep.subr.mxu0 0.0
  %60 = vmatpush1.msra.mxu0 %v35
  %61 = vmatprep.subr.mxu0 0.0
  %62 = vmatpush1.msra.mxu0 %v36
  %63 = vmatprep.subr.mxu0 0.0
  %64 = vmatpush1.msra.mxu0 %v37
  %65 = vmatprep.subr.mxu0 0.0
  %66 = vmatpush1.msra.mxu0 %v38
  %67 = vmatprep.subr.mxu0 0.0
  %68 = vmatpush1.msra.mxu0 %v39
  %69 = vmatprep.subr.mxu0 0.0
  %70 = vmatpush1.msra.mxu0 %v40
  %71 = vmatprep.subr.mxu0 0.0
  %72 = vmatpush1.msra.mxu0 %v41
  %73 = vmatprep.subr.mxu0 0.0
  %74 = vmatpush1.msra.mxu0 %v42
  %75 = vmatprep.subr.mxu0 0.0
  %76 = vmatpush1.msra.mxu0 0.0
  %77 = vmatprep.subr.mxu0 0.0
  %78 = vmatpush1.msra.mxu0 0.0
  %79 = vmatprep.subr.mxu0 0.0
  %80 = vmatpush1.msra.mxu0 0.0
  %81 = vmatprep.subr.mxu0 0.0
  %82 = vmatpush1.msra.mxu0 0.0
  %83 = vmatprep.subr.mxu0 0.0
  %84 = vmatpush1.msra.mxu0 0.0
  %85 = vmatprep.subr.mxu0 0.0
  %86 = vmatpush1.msra.mxu0 0.0
  %87 = vmatprep.subr.mxu0 0.0
  %88 = vmatpush1.msra.mxu0 0.0
  %89 = vmatprep.subr.mxu0 0.0
  %90 = vmatpush1.msra.mxu0 0.0
  %91 = vmatprep.subr.mxu0 0.0
  %92 = vmatpush1.msra.mxu0 0.0
  %93 = vmatprep.subr.mxu0 0.0
  %94 = vmatpush1.msra.mxu0 0.0
  %95 = vmatprep.subr.mxu0 0.0
  %96 = vmatpush1.msra.mxu0 0.0
  %97 = vmatprep.subr.mxu0 0.0
  %98 = vmatpush1.msra.mxu0 0.0
  %99 = vmatprep.subr.mxu0 0.0
  %100 = vmatpush1.msra.mxu0 0.0
  %101 = vmatprep.subr.mxu0 0.0
  %102 = vmatpush1.msra.mxu0 0.0
  %103 = vmatprep.subr.mxu0 0.0
  %104 = vmatpush1.msra.mxu0 0.0
  %105 = vmatprep.subr.mxu0 0.0
  %106 = vmatpush1.msra.mxu0 0.0
  %107 = vmatprep.mubr.f32.mxu0 0.0
  %108 = vmatmul.mubr.f32.gmra.mrb[0].mxu0 %v23
  %v109 = vpop.f32.mrb[0].mxu0
  %v110 = vadd.f32 0.0, %v109
  %v111 = vpop.f32.mrb[0].mxu0
  %112 = vmatprep.mubr.f32.mxu0 0.0
  %113 = vmatmul.mubr.f32.gmra.mrb[0].mxu0 %v24
  %v114 = vpop.f32.mrb[0].mxu0
  %v115 = vadd.f32 0.0, %v114
  %v116 = vpop.f32.mrb[0].mxu0
  %117 = vmatprep.mubr.f32.mxu0 0.0
  %118 = vmatmul.mubr.f32.gmra.mrb[0].mxu0 %v25
  %v119 = vpop.f32.mrb[0].mxu0
  %v120 = vadd.f32 0.0, %v119
  %v121 = vpop.f32.mrb[0].mxu0
  %122 = vmatprep.mubr.f32.mxu0 0.0
  %123 = vmatmul.mubr.f32.gmra.mrb[0].mxu0 %v26
  %v124 = vpop.f32.mrb[0].mxu0
  %v125 = vadd.f32 0.0, %v124
  %v126 = vpop.f32.mrb[0].mxu0
  %127 = vdwg.mxu0
  %v128 = vld [vmem:[%s2] sm:$0x1]
  %v130 = vlaneseq
  %v131 = vshrl.u32 %v130, 7
  %v132 = vsub.s32 0, %v131
  %v133 = vrot.slane %v128, %v132
  %v135 = vmul.f32 %v110, %v133
  %v136 = vmul.f32 %v115, %v133
  %v137 = vmul.f32 %v120, %v133
  %v138 = vmul.f32 %v125, %v133
  %v139 = vld [vmem:[%s3] sm:$0x1]
  %v141 = vlaneseq
  %v142 = vshrl.u32 %v141, 7
  %v143 = vsub.s32 0, %v142
  %v144 = vrot.slane %v139, %v143
  %v146 = vadd.f32 %v135, %v144
  %v147 = vadd.f32 %v136, %v144
  %v148 = vadd.f32 %v137, %v144
  %v149 = vadd.f32 %v138, %v144
  %v150 = vmax.f32 %v146, 0.0
  %v151 = vmax.f32 %v147, 0.0
  %v152 = vmax.f32 %v148, 0.0
  %v153 = vmax.f32 %v149, 0.0
  %v154 = vld [vmem:[%s4] sm:$0xff]
  %v155 = vld [vmem:[%s4 + $0x8] sm:$0xff]
  %v156 = vld [vmem:[%s5] sm:$0x1]
  %v158 = vlaneseq
  %v159 = vshrl.u32 %v158, 7
  %v160 = vsub.s32 0, %v159
  %v161 = vrot.slane %v156, %v160
  %vm163 = vcmask 130048
  %v165 = vsel %vm163, %v150, 0
  %v168 = vsel %vm163, %v151, 0
  %v171 = vsel %vm163, %v152, 0
  %v174 = vsel %vm163, %v153, 0
  %176 = vmatprep.subr.mxu0 0.0
  %177 = vmatpush1.msra.mxu0 %v154
  %178 = vmatprep.subr.mxu0 0.0
  %179 = vmatpush1.msra.mxu0 %v155
  %180 = vmatprep.subr.mxu0 0.0
  %181 = vmatpush1.msra.mxu0 0.0
  %182 = vmatprep.subr.mxu0 0.0
  %183 = vmatpush1.msra.mxu0 0.0
  %184 = vmatprep.subr.mxu0 0.0
  %185 = vmatpush1.msra.mxu0 0.0
  %186 = vmatprep.subr.mxu0 0.0
  %187 = vmatpush1.msra.mxu0 0.0
  %188 = vmatprep.subr.mxu0 0.0
  %189 = vmatpush1.msra.mxu0 0.0
  %190 = vmatprep.subr.mxu0 0.0
  %191 = vmatpush1.msra.mxu0 0.0
  %192 = vmatprep.subr.mxu0 0.0
  %193 = vmatpush1.msra.mxu0 0.0
  %194 = vmatprep.subr.mxu0 0.0
  %195 = vmatpush1.msra.mxu0 0.0
  %196 = vmatprep.subr.mxu0 0.0
  %197 = vmatpush1.msra.mxu0 0.0
  %198 = vmatprep.subr.mxu0 0.0
  %199 = vmatpush1.msra.mxu0 0.0
  %200 = vmatprep.subr.mxu0 0.0
  %201 = vmatpush1.msra.mxu0 0.0
  %202 = vmatprep.subr.mxu0 0.0
  %203 = vmatpush1.msra.mxu0 0.0
  %204 = vmatprep.subr.mxu0 0.0
  %205 = vmatpush1.msra.mxu0 0.0
  %206 = vmatprep.subr.mxu0 0.0
  %207 = vmatpush1.msra.mxu0 0.0
  %208 = vmatprep.subr.mxu0 0.0
  %209 = vmatpush1.msra.mxu0 0.0
  %210 = vmatprep.subr.mxu0 0.0
  %211 = vmatpush1.msra.mxu0 0.0
  %212 = vmatprep.subr.mxu0 0.0
  %213 = vmatpush1.msra.mxu0 0.0
  %214 = vmatprep.subr.mxu0 0.0
  %215 = vmatpush1.msra.mxu0 0.0
  %216 = vmatprep.subr.mxu0 0.0
  %217 = vmatpush1.msra.mxu0 0.0
  %218 = vmatprep.subr.mxu0 0.0
  %219 = vmatpush1.msra.mxu0 0.0
  %220 = vmatprep.subr.mxu0 0.0
  %221 = vmatpush1.msra.mxu0 0.0
  %222 = vmatprep.subr.mxu0 0.0
  %223 = vmatpush1.msra.mxu0 0.0
  %224 = vmatprep.subr.mxu0 0.0
  %225 = vmatpush1.msra.mxu0 0.0
  %226 = vmatprep.subr.mxu0 0.0
  %227 = vmatpush1.msra.mxu0 0.0
  %228 = vmatprep.subr.mxu0 0.0
  %229 = vmatpush1.msra.mxu0 0.0
  %230 = vmatprep.subr.mxu0 0.0
  %231 = vmatpush1.msra.mxu0 0.0
  %232 = vmatprep.subr.mxu0 0.0
  %233 = vmatpush1.msra.mxu0 0.0
  %234 = vmatprep.subr.mxu0 0.0
  %235 = vmatpush1.msra.mxu0 0.0
  %236 = vmatprep.subr.mxu0 0.0
  %237 = vmatpush1.msra.mxu0 0.0
  %238 = vmatprep.subr.mxu0 0.0
  %239 = vmatpush1.msra.mxu0 0.0
  %240 = vmatprep.mubr.f32.mxu0 0.0
  %241 = vmatmul.mubr.f32.gmra.mrb[0].mxu0 %v165
  %v242 = vpop.f32.mrb[0].mxu0
  %v243 = vadd.f32 %v161, %v242
  %v244 = vpop.f32.mrb[0].mxu0
  %245 = vmatprep.mubr.f32.mxu0 0.0
  %246 = vmatmul.mubr.f32.gmra.mrb[0].mxu0 %v168
  %v247 = vpop.f32.mrb[0].mxu0
  %v248 = vadd.f32 %v161, %v247
  %v249 = vpop.f32.mrb[0].mxu0
  %250 = vmatprep.mubr.f32.mxu0 0.0
  %251 = vmatmul.mubr.f32.gmra.mrb[0].mxu0 %v171
  %v252 = vpop.f32.mrb[0].mxu0
  %v253 = vadd.f32 %v161, %v252
  %v254 = vpop.f32.mrb[0].mxu0
  %255 = vmatprep.mubr.f32.mxu0 0.0
  %256 = vmatmul.mubr.f32.gmra.mrb[0].mxu0 %v174
  %v257 = vpop.f32.mrb[0].mxu0
  %v258 = vadd.f32 %v161, %v257
  %v259 = vpop.f32.mrb[0].mxu0
  %260 = vdwg.mxu0
  %261 = vst [vmem:[%s6] sm:$0xff] %v243
  %262 = vst [vmem:[%s6 + $0x8] sm:$0xff] %v248
  %263 = vst [vmem:[%s6 + $0x10] sm:$0xff] %v253
  %264 = vst [vmem:[%s6 + $0x18] sm:$0xff] %v258
  // Predicated region
  $region26: #{mask_features_sieve.3} parent=0 // pred_check
    _
  $region27: #{mask_features_sieve.3} parent=0 // pred_check_branch
    %266 = sbr.rel (0) target = $region29
  $region28: #{mask_features_sieve.3} parent=0 // pred_region
    _
  $region29: #{mask_features_sieve.3} parent=0 // pred_fallthru
    _
  // Predicated region
  $region30: #{mask_features_sieve.3} parent=0 // pred_check
    _
  $region31: #{mask_features_sieve.3} parent=0 // pred_check_branch
    %268 = sbr.rel (0) target = $region33
  $region32: #{mask_features_sieve.3} parent=0 // pred_region
    _
  $region33: #{mask_features_sieve.3} parent=0 // pred_fallthru
    _

</llo_original>
